<compile_context>
chip_gen: v5e
topology: v5e:2x2
jax: 0.10.0
libtpu: 0.0.40
codegen_flags: <defaults>
</compile_context>

<pallas_src>
import math
import functools

import jax
import jax.numpy as jnp
import numpy as np
from jax.experimental import pallas as pl
from jax.experimental.pallas import tpu as pltpu


def _pos_enc_kernel(x_ref, pe_ref, o_ref, *, xscale: float):
    # x_ref / o_ref: (tN, tT, Cg) tiles; pe_ref: (tT, Cg) tile (batch-invariant,
    # broadcasts over the leading batch-block axis).
    x = x_ref[...].astype(jnp.float32)
    pe = pe_ref[...].astype(jnp.float32)
    o_ref[...] = (x * jnp.float32(xscale) + pe).astype(o_ref.dtype)


def _make_pe_table(T: int, C: int, d_model: int) -> jax.Array:
    """(T, C) positional-encoding table, one transcendental per element."""
    pos = jnp.arange(T, dtype=jnp.float32)[:, None]              # (T, 1)
    col = jnp.arange(C, dtype=jnp.float32)[None, :]              # (1, C)
    parity = (jnp.arange(C) % 2).astype(jnp.float32)[None, :]    # 0 even, 1 odd
    col_even = col - parity                                      # 2 * (j // 2)
    inv_freq = jnp.exp(col_even * (-math.log(10000.0) / d_model))
    # cos(x) = sin(x + pi/2): odd columns get a pi/2 phase -> single sin.
    angle = pos * inv_freq + (math.pi / 2.0) * parity
    return jnp.sin(angle)                                        # (T, C) f32


def _sublane(itemsize: int) -> int:
    return {4: 8, 2: 16, 1: 32}.get(itemsize, 8)


def _pick_tiles(N: int, Tg: int, Cg: int, itemsize: int,
                budget_bytes: int = 12 * 1024 * 1024):
    """Pick (tT, tN): largest blocks whose double-buffered working set
    (x-in + out, tN rows each, plus pe) fits a conservative VMEM budget."""
    sub = _sublane(itemsize)
    row_bytes = Cg * itemsize
    # tN = 1 cost per time row: 2 buffers * (x + out + pe) = 6 * row_bytes.
    tT = min(Tg, max(1, budget_bytes // max(6 * row_bytes, 1)))
    if tT < Tg:
        # Sublane-align; "== full dim" also satisfies the (8,128) rule.
        tT = min(max(sub, (tT // sub) * sub), Tg)
        return tT, 1
    # Whole time axis fits with tN = 1 -> grow the batch block:
    #   2 * tT * row_bytes * (2*tN + 1) <= budget
    tn_cap = max(1, int((budget_bytes // (2 * tT * row_bytes) - 1) // 2))
    tn_cap = min(tn_cap, N)
    tN = 1
    for cand in range(tn_cap, 0, -1):        # prefer a clean divisor of N
        if N % cand == 0:
            tN = cand
            break
    return tT, tN


def positional_encoding(x: jax.Array, d_model: int) -> jax.Array:
    """x: (N, T, C) with C == d_model. Returns x * sqrt(d_model) + PE (eval)."""
    N, T, C = x.shape
    assert C == d_model
    xscale = math.sqrt(d_model)
    itemsize = jnp.dtype(x.dtype).itemsize

    # PyTorch stores pe in x.dtype; doing the same also halves PE HBM bytes
    # for bf16 inputs.  Compute is still widened to f32 inside the kernel.
    pe = _make_pe_table(T, C, d_model).astype(x.dtype)

    # Lane-densify: fold g consecutive time rows into the lane axis so the
    # kernel's last dim is a multiple of 128 (unmasked, full-lane stores).
    # Pure contiguous reshape; PE folds identically, semantics unchanged.
    g = 1
    if C % 128 != 0:
        cand = 128 // math.gcd(C, 128)
        if T % cand == 0 and cand * C * itemsize <= 64 * 1024:
            g = cand
    Tg, Cg = T // g, C * g
    x_r = x.reshape(N, Tg, Cg)
    pe_r = pe.reshape(Tg, Cg)

    tT, tN = _pick_tiles(N, Tg, Cg, itemsize)
    grid = (pl.cdiv(Tg, tT), pl.cdiv(N, tN))   # time outer, batch inner

    kernel = functools.partial(_pos_enc_kernel, xscale=xscale)

    out = pl.pallas_call(
        kernel,
        out_shape=jax.ShapeDtypeStruct((N, Tg, Cg), x.dtype),
        grid_spec=pltpu.PrefetchScalarGridSpec(
            num_scalar_prefetch=0,
            grid=grid,
            in_specs=[
                pl.BlockSpec((tN, tT, Cg), lambda t, n: (n, t, 0)),   # x
                # PE block index is constant across the inner (batch) sweep,
                # so its VMEM tile stays resident between iterations.
                pl.BlockSpec((tT, Cg), lambda t, n: (t, 0)),          # pe
            ],
            out_specs=pl.BlockSpec((tN, tT, Cg), lambda t, n: (n, t, 0)),
        ),
        compiler_params=pltpu.CompilerParams(
            # Independent elementwise work on both axes -> shard across TCs
            # on megacore parts (no-op on single-TC chips).
            dimension_semantics=("parallel", "parallel"),
        ),
    )(x_r, pe_r)
    return out.reshape(N, T, C)


def _reference(x: np.ndarray, d_model: int) -> np.ndarray:
    """Pure-numpy reference mirroring the PyTorch module (eval mode)."""
    N, T, C = x.shape
    pe = np.zeros((T, C), dtype=np.float32)
    position = np.arange(0, T, dtype=np.float32)[:, None]
    div_term = np.exp(
        np.arange(0, C, 2, dtype=np.float32) * -(math.log(10000.0) / d_model)
    )
    pe[:, 0::2] = np.sin(position * div_term)
    pe[:, 1::2] = np.cos(position * div_term)
    return x * math.sqrt(d_model) + pe[None, :, :]


if __name__ == "__main__":
    key = jax.random.PRNGKey(0)

    # Case 1: lane-foldable layout (C=32 -> folds 4 time rows into 128 lanes).
    N, T, d_model = 2, 16, 32
    k1, k2 = jax.random.split(key)
    x1 = jax.random.normal(k1, (N, T, d_model), dtype=jnp.float32)
    out1 = jax.block_until_ready(positional_encoding(x1, d_model))
    np.testing.assert_allclose(
        np.asarray(out1), _reference(np.asarray(x1), d_model),
        rtol=1e-5, atol=1e-5)

    # Case 2: fallback layout (T not divisible by the fold factor -> g = 1).
    N2, T2, d2 = 3, 12, 40
    x2 = jax.random.normal(k2, (N2, T2, d2), dtype=jnp.float32)
    out2 = jax.block_until_ready(positional_encoding(x2, d2))
    np.testing.assert_allclose(
        np.asarray(out2), _reference(np.asarray(x2), d2),
        rtol=1e-5, atol=1e-5)

    print("KERNEL_OK")
</pallas_src>

<mosaic_0001>
module attributes {stable_mosaic.version = 11 : i64} {
  func.func @_pos_enc_kernel(%arg0: i32, %arg1: i32, %arg2: memref<2x4x128xf32, #tpu.memory_space<vmem>>, %arg3: memref<4x128xf32, #tpu.memory_space<vmem>>, %arg4: memref<2x4x128xf32, #tpu.memory_space<vmem>>) attributes {dimension_semantics = [#tpu.dimension_semantics<parallel>, #tpu.dimension_semantics<parallel>], iteration_bounds = array<i64: 1, 1>, scalar_prefetch = 0 : i64, scratch_operands = 0 : i64, tpu.core_type = #tpu.core_type<tc>, window_params = [{transform_indices = @transform_0, window_bounds = array<i64: 2, 4, 128>}, {transform_indices = @transform_1, window_bounds = array<i64: 4, 128>}, {transform_indices = @transform_2, window_bounds = array<i64: 2, 4, 128>}]} {
    %c0 = arith.constant 0 : index
    %c0_0 = arith.constant 0 : index
    %c0_1 = arith.constant 0 : index
    %0 = vector.load %arg2[%c0, %c0_0, %c0_1] : memref<2x4x128xf32, #tpu.memory_space<vmem>>, vector<2x4x128xf32>
    %c0_2 = arith.constant 0 : index
    %c0_3 = arith.constant 0 : index
    %1 = vector.load %arg3[%c0_2, %c0_3] : memref<4x128xf32, #tpu.memory_space<vmem>>, vector<4x128xf32>
    %cst = arith.constant 5.65685415 : f32
    %2 = vector.broadcast %cst : f32 to vector<2x4x128xf32>
    %3 = arith.mulf %0, %2 : vector<2x4x128xf32>
    %4 = vector.shape_cast %1 : vector<4x128xf32> to vector<1x4x128xf32>
    %5 = vector.broadcast %4 : vector<1x4x128xf32> to vector<2x4x128xf32>
    %6 = arith.addf %3, %5 : vector<2x4x128xf32>
    %c0_4 = arith.constant 0 : index
    %c0_5 = arith.constant 0 : index
    %c0_6 = arith.constant 0 : index
    %7 = vector.load %arg4[%c0_4, %c0_5, %c0_6] : memref<2x4x128xf32, #tpu.memory_space<vmem>>, vector<2x4x128xf32>
    tpu.vector_store %arg4[%c0_4, %c0_5, %c0_6], %6 {strides = array<i32>} : memref<2x4x128xf32, #tpu.memory_space<vmem>>, vector<2x4x128xf32>,
    return
  }
  func.func @transform_0(%arg0: i32, %arg1: i32) -> (i32, i32, i32) {
    %c0_i32 = arith.constant 0 : i32
    %c0_i32_0 = arith.constant 0 : i32
    return %arg1, %arg0, %c0_i32 : i32, i32, i32
  }
  func.func @transform_1(%arg0: i32, %arg1: i32) -> (i32, i32) {
    %c0_i32 = arith.constant 0 : i32
    %c0_i32_0 = arith.constant 0 : i32
    return %arg0, %c0_i32 : i32, i32
  }
  func.func @transform_2(%arg0: i32, %arg1: i32) -> (i32, i32, i32) {
    %c0_i32 = arith.constant 0 : i32
    %c0_i32_0 = arith.constant 0 : i32
    return %arg1, %arg0, %c0_i32 : i32, i32, i32
  }
}

</mosaic_0001>

<llo_original>
// kernel: tpu_custom_call.1
$region0: #{tpu_custom_call.1}
  #allocation0 [shape = 'u32[]', space=smem, size = 0x4, offset = 0x4, fixed_abs, tag = 'smem constant byte address 0x4 - core index']
  #allocation1 [shape = 'u32[72,128]{1,0:T(1,128)}', space=vmem, size = 0x9000, scoped, tag = 'internal scratch']
  %s0 = inlined_call_operand.hbm [shape: f32[2,4,128], index: 0, kind: input, shape index: {}]
  %s1 = inlined_call_operand.hbm [shape: f32[4,128], index: 1, kind: input, shape index: {}]
  %s2 = inlined_call_operand.hbm [shape: f32[2,4,128], index: 2, kind: output, shape index: {}]
  %s3 = sld [smem:[#allocation0]]
  $region26: #{tpu_custom_call.1} parent=0
    _
  %s5 = ssub.s32 1, %s3
  %s6 = scalar_select 0, %s5, %s3
  $region1: #{tpu_custom_call.1} parent=0
    #allocation2 [shape = 'u8[4096]{0}', space=vmem, size = 0x1000, scoped, tag = 'input window, operand 0, single buffered']
    #allocation3 [shape = 's32[1]{0}', space=sflag, size = 0x4, scoped, tag = 'scoped memory for tpu_custom_call.1']
    #allocation4 [shape = 's32[1]{0}', space=sflag, size = 0x4, scoped, tag = 'scoped memory for tpu_custom_call.1']
    #allocation5 [shape = 'u8[2048]{0}', space=vmem, size = 0x800, scoped, tag = 'input window, operand 1, single buffered']
    #allocation6 [shape = 's32[1]{0}', space=sflag, size = 0x4, scoped, tag = 'scoped memory for tpu_custom_call.1']
    #allocation7 [shape = 'u8[4096]{0}', space=vmem, size = 0x1000, scoped, tag = 'output window, operand 0, single buffered']
    %7 = vsyncpa [#allocation3], 0
    %8 = vsyncpa [#allocation6], 0
    %9 = vsyncpa [#allocation4], 0
    // Predicated region
    $region2: #{tpu_custom_call.1} parent=1 // pred_check
      _
    $region3: #{tpu_custom_call.1} parent=1 // pred_check_branch
      %11 = sbr.rel (0) target = $region5
    $region4: #{tpu_custom_call.1} parent=1 // pred_region
      %13 = vsyncadd [#allocation3], 0
      %s14 = sshll.u32 %s0, 4
      %s15 = int_to_ptr.hbm [resolvable:$true] %s14
      %s16 = sshll.u32 [#allocation2], 4
      %s17 = int_to_ptr.vmem [resolvable:$true] %s16
      %22 = dma.hbm_to_vmem [thread:$0]  %s15, 128, %s17, [#allocation3], 64, 64, 4
    $region5: #{tpu_custom_call.1} parent=1 // pred_fallthru
      _
    // Predicated region
    $region6: #{tpu_custom_call.1} parent=1 // pred_check
      _
    $region7: #{tpu_custom_call.1} parent=1 // pred_check_branch
      %24 = sbr.rel (0) target = $region9
    $region8: #{tpu_custom_call.1} parent=1 // pred_region
      %26 = vsyncadd [#allocation6], 0
      %s28 = sshll.u32 %s1, 4
      %s29 = int_to_ptr.hbm [resolvable:$true] %s28
      %s30 = sshll.u32 [#allocation5], 4
      %s31 = int_to_ptr.vmem [resolvable:$true] %s30
      %33 = dma.hbm_to_vmem [thread:$0]  %s29, 64, %s31, [#allocation6]
    $region9: #{tpu_custom_call.1} parent=1 // pred_fallthru
      _
    // Predicated region
    $region10: #{tpu_custom_call.1} parent=1 // pred_check
      _
    $region11: #{tpu_custom_call.1} parent=1 // pred_check_branch
      %35 = sbr.rel (0) target = $region13
    $region12: #{tpu_custom_call.1} parent=1 // pred_region
      %37 = dma.done [#allocation3], 128
    $region13: #{tpu_custom_call.1} parent=1 // pred_fallthru
      _
    // Predicated region
    $region14: #{tpu_custom_call.1} parent=1 // pred_check
      _
    $region15: #{tpu_custom_call.1} parent=1 // pred_check_branch
      %39 = sbr.rel (0) target = $region17
    $region16: #{tpu_custom_call.1} parent=1 // pred_region
      %41 = dma.done [#allocation6], 64
    $region17: #{tpu_custom_call.1} parent=1 // pred_fallthru
      _
    %v42 = vld [vmem:[#allocation2] sm:$0xf]
    %v43 = vld [vmem:[#allocation2 + $0x4] sm:$0xf]
    %v44 = vld [vmem:[#allocation5] sm:$0xf]
    %v45 = vmul.f32 %v42, 5.656854
    %v46 = vmul.f32 %v43, 5.656854
    %v47 = vadd.f32 %v45, %v44
    %v48 = vadd.f32 %v46, %v44
    %49 = vst [vmem:[#allocation7] sm:$0xf] %v47
    %50 = vst [vmem:[#allocation7 + $0x4] sm:$0xf] %v48
    // Predicated region
    $region18: #{tpu_custom_call.1} parent=1 // pred_check
      _
    $region19: #{tpu_custom_call.1} parent=1 // pred_check_branch
      %52 = sbr.rel (0) target = $region21
    $region20: #{tpu_custom_call.1} parent=1 // pred_region
      %54 = vsyncadd [#allocation4], 0
      %s55 = sshll.u32 [#allocation7], 4
      %s56 = int_to_ptr.vmem [resolvable:$true] %s55
      %s57 = sshll.u32 %s2, 4
      %s58 = int_to_ptr.hbm [resolvable:$true] %s57
      %63 = dma.vmem_to_hbm [thread:$0]  %s56, 128, %s58, [#allocation4], 64, 64, 4
    $region21: #{tpu_custom_call.1} parent=1 // pred_fallthru
      _
    // Predicated region
    $region22: #{tpu_custom_call.1} parent=1 // pred_check
      _
    $region23: #{tpu_custom_call.1} parent=1 // pred_check_branch
      %65 = sbr.rel (0) target = $region25
    $region24: #{tpu_custom_call.1} parent=1 // pred_region
      %67 = dma.done [#allocation4], 128
    $region25: #{tpu_custom_call.1} parent=1 // pred_fallthru
      _
    %68 = vsyncpa [#allocation3], 1
    %69 = vsyncpa [#allocation6], 1
    %70 = vsyncpa [#allocation4], 1

</llo_original>
